<compile_context>
chip_gen: v7x
topology: tpu7x:2x2x1
jax: 0.10.0
libtpu: 0.0.40
codegen_flags: <defaults>
</compile_context>

<pallas_src>
import functools

import jax
import jax.numpy as jnp
from jax import lax
from jax.experimental import pallas as pl
from jax.experimental.pallas import tpu as pltpu

EPS = 1e-5        # torch.nn.BatchNorm1d default eps
SLOPE = 0.01      # torch.nn.LeakyReLU default negative_slope
DIM2 = 64
DIM3 = 16
LANE = 128

# Largest lane-padded batch handled by the grid-less kernel (peak live VMEM is
# dominated by a1 at 256*B_pad bytes); larger batches use the chunked grid path.
GRIDLESS_MAX_LANES = 32768
CHUNK = 8192      # lanes per block in the gridded path


def _leaky(h):
    # max(h, a*h) == LeakyReLU(h) for 0 < a < 1: 2 VALU ops/elem vs 3 for where().
    return jnp.maximum(h, SLOPE * h)


# ----------------------------------------------------------------------------
# Grid-less kernel: whole (padded) batch resident in VMEM.
# ----------------------------------------------------------------------------
def _kernel_nogrid(n_ref, inv_ref, x_ref, bn1_ref, w2_ref, p2_ref, o_ref, *, masked):
    # x_ref: (1, Bp) batch on lanes, zero-padded.  NOTE: padded lanes of a1/h2 carry
    # garbage by design; they are masked out of BN2 stats and sliced off by the
    # wrapper — never reduce over them without the mask.
    x = x_ref[...]
    scale1 = bn1_ref[:, 0:1]                      # (64,1) folded fc1+bn1 scale
    shift1 = bn1_ref[:, 1:2]                      # (64,1) folded fc1+bn1 shift
    a1 = _leaky(scale1 * x + shift1)              # (64, Bp)  pure VPU (fc1 has K=1)

    # fc2 on the MXU, lane-dense output over the batch.  fc2 bias b2 cancels exactly
    # under training-mode BN2 mean subtraction, so it is never added.
    h2 = jnp.dot(w2_ref[...], a1, preferred_element_type=jnp.float32)   # (16, Bp)

    inv_n = inv_ref[0]
    if masked:
        n = n_ref[0]
        lane = lax.broadcasted_iota(jnp.int32, x.shape, 1)
        maskf = (lane < n).astype(jnp.float32)    # (1, Bp) valid-batch mask
        mean2 = jnp.sum(h2 * maskf, axis=-1, keepdims=True) * inv_n
        d = h2 - mean2                            # needed for normalization anyway
        var2 = jnp.sum((d * maskf) * d, axis=-1, keepdims=True) * inv_n  # centered
    else:
        mean2 = jnp.sum(h2, axis=-1, keepdims=True) * inv_n
        d = h2 - mean2
        var2 = jnp.sum(d * d, axis=-1, keepdims=True) * inv_n

    g2 = p2_ref[:, 0:1]
    be2 = p2_ref[:, 1:2]
    w3 = p2_ref[:, 2:3]
    b3 = p2_ref[0:1, 3:4]
    a2 = _leaky(d * (g2 * lax.rsqrt(var2 + EPS)) + be2)                 # (16, Bp)
    # fc3 (N=1): VPU multiply + 16-way sublane reduce; stays lane-dense over B.
    o_ref[...] = jnp.sum(w3 * a2, axis=0, keepdims=True) + b3           # (1, Bp)


# ----------------------------------------------------------------------------
# Gridded kernel for large batches: grid = (2, nchunks).
#   pass 0: accumulate masked BN2 sum / sum-of-squares into VMEM scratch.
#   pass 1: recompute the chunk, normalize with global stats, write output.
# ----------------------------------------------------------------------------
def _kernel_grid(n_ref, x_ref, bn1_ref, w2_ref, p2_ref, o_ref, s_ref, ss_ref):
    p = pl.program_id(0)   # 0: stats pass, 1: normalize/output pass
    c = pl.program_id(1)   # batch chunk

    x = x_ref[...]                                             # (1, CHUNK)
    a1 = _leaky(bn1_ref[:, 0:1] * x + bn1_ref[:, 1:2])         # (64, CHUNK)
    h2 = jnp.dot(w2_ref[...], a1, preferred_element_type=jnp.float32)   # (16, CHUNK)

    n = n_ref[0]
    lane = lax.broadcasted_iota(jnp.int32, x.shape, 1) + c * CHUNK
    maskf = (lane < n).astype(jnp.float32)                     # (1, CHUNK)

    @pl.when(p == 0)
    def _():
        @pl.when(c == 0)
        def _():
            s_ref[...] = jnp.zeros_like(s_ref)
            ss_ref[...] = jnp.zeros_like(ss_ref)
        h2m = h2 * maskf
        s_ref[...] += jnp.sum(h2m, axis=-1, keepdims=True)
        ss_ref[...] += jnp.sum(h2m * h2, axis=-1, keepdims=True)

    @pl.when(p == 1)
    def _():
        count = n.astype(jnp.float32)
        mean2 = s_ref[...] / count                             # (16, 1)
        # E[X^2] - mean^2 across chunks; clamp against tiny negative cancellation.
        var2 = jnp.maximum(ss_ref[...] / count - mean2 * mean2, 0.0)
        g2 = p2_ref[:, 0:1]
        be2 = p2_ref[:, 1:2]
        w3 = p2_ref[:, 2:3]
        b3 = p2_ref[0:1, 3:4]
        a2 = _leaky((h2 - mean2) * (g2 * lax.rsqrt(var2 + EPS)) + be2)
        o_ref[...] = jnp.sum(w3 * a2, axis=0, keepdims=True) + b3


# ----------------------------------------------------------------------------
# Wrappers
# ----------------------------------------------------------------------------
def pack_params(params):
    """Precompute everything that does not depend on the input batch (call once)."""
    (w1, b1, g1, be1, w2, b2, g2, be2, w3, b3) = params
    del b1, b2   # both cancel exactly under training-mode BatchNorm mean subtraction
    w1v = w1[:, 0].astype(jnp.float32)
    pre1 = jnp.stack([w1v * g1, w1v * w1v, be1], axis=1)                 # (64, 3)
    p2 = jnp.stack([g2, be2, w3[0, :], jnp.full((DIM3,), b3[0])], axis=1)  # (16, 4)
    return dict(pre1=pre1.astype(jnp.float32),
                w2=w2.astype(jnp.float32),
                p2=p2.astype(jnp.float32))


def metrics_transform(x, packed, *, force_grid=False):
    """x: (B, 1) float32 -> (B, 1) float32 (MetricsTransform.forward, training mode)."""
    B = x.shape[0]
    xf = x[:, 0].astype(jnp.float32)

    # bn1 statistics in the wrapper (one XLA reduction) + fc1/bn1 fold:
    #   scale1 = w1*g1 * rsqrt(w1^2*var_x + eps),  shift1 = be1 - scale1*mu_x
    mu_x = jnp.mean(xf)
    var_x = jnp.mean(jnp.square(xf - mu_x))          # centered variance
    pre1 = packed["pre1"]
    scale1 = pre1[:, 0] * lax.rsqrt(pre1[:, 1] * var_x + EPS)
    shift1 = pre1[:, 2] - scale1 * mu_x
    bn1 = jnp.stack([scale1, shift1], axis=1)        # (64, 2)

    n_arr = jnp.array([B], jnp.int32)                # dynamic n_valid -> no per-B recompile
    inv_arr = jnp.array([1.0 / B], jnp.float32)

    use_grid = force_grid or (B > GRIDLESS_MAX_LANES)

    if not use_grid:
        b_pad = ((B + LANE - 1) // LANE) * LANE
        masked = (B != b_pad)
        if masked:
            x_pad = jnp.zeros((1, b_pad), jnp.float32).at[0, :B].set(xf)
        else:
            x_pad = xf.reshape(1, b_pad)

        vmem = pl.BlockSpec(memory_space=pltpu.MemorySpace.VMEM)
        smem = pl.BlockSpec(memory_space=pltpu.MemorySpace.SMEM)
        vmem_bytes = int(min(64 * 2**20, max(32 * 2**20, 1024 * b_pad)))
        out = pl.pallas_call(
            functools.partial(_kernel_nogrid, masked=masked),
            out_shape=jax.ShapeDtypeStruct((1, b_pad), jnp.float32),
            in_specs=[smem, smem, vmem, vmem, vmem, vmem],
            out_specs=vmem,
            compiler_params=pltpu.CompilerParams(vmem_limit_bytes=vmem_bytes),
        )(n_arr, inv_arr, x_pad, bn1, packed["w2"], packed["p2"])
    else:
        b_pad = ((B + CHUNK - 1) // CHUNK) * CHUNK
        nchunks = b_pad // CHUNK
        if B == b_pad:
            x_pad = xf.reshape(1, b_pad)
        else:
            x_pad = jnp.zeros((1, b_pad), jnp.float32).at[0, :B].set(xf)

        grid_spec = pltpu.PrefetchScalarGridSpec(
            num_scalar_prefetch=1,
            grid=(2, nchunks),
            in_specs=[
                pl.BlockSpec((1, CHUNK), lambda p, c, n: (0, c)),
                pl.BlockSpec((DIM2, 2), lambda p, c, n: (0, 0)),
                pl.BlockSpec((DIM3, DIM2), lambda p, c, n: (0, 0)),
                pl.BlockSpec((DIM3, 4), lambda p, c, n: (0, 0)),
            ],
            # Output block stays 0 during the stats pass (never written there, never
            # flushed) and walks the chunks during the normalize pass.
            out_specs=pl.BlockSpec((1, CHUNK), lambda p, c, n: (0, p * c)),
            scratch_shapes=[pltpu.VMEM((DIM3, 1), jnp.float32),
                            pltpu.VMEM((DIM3, 1), jnp.float32)],
        )
        out = pl.pallas_call(
            _kernel_grid,
            grid_spec=grid_spec,
            out_shape=jax.ShapeDtypeStruct((1, b_pad), jnp.float32),
            compiler_params=pltpu.CompilerParams(
                dimension_semantics=("arbitrary", "arbitrary")),
        )(n_arr, x_pad, bn1, packed["w2"], packed["p2"])

    return out[0, :B].reshape(B, 1)


metrics_transform_jit = jax.jit(metrics_transform, static_argnames=("force_grid",))


# ----------------------------------------------------------------------------
# Parameter init (torch layouts) and pure-JAX reference
# ----------------------------------------------------------------------------
def init_params(key):
    ks = jax.random.split(key, 6)
    w1 = jax.random.uniform(ks[0], (DIM2, 1), jnp.float32, -1.0, 1.0)     # Linear(1,64).weight
    b1 = jax.random.uniform(ks[1], (DIM2,), jnp.float32, -1.0, 1.0)
    bd2 = 1.0 / DIM2 ** 0.5
    w2 = jax.random.uniform(ks[2], (DIM3, DIM2), jnp.float32, -bd2, bd2)  # Linear(64,16).weight
    b2 = jax.random.uniform(ks[3], (DIM3,), jnp.float32, -bd2, bd2)
    bd3 = 1.0 / DIM3 ** 0.5
    w3 = jax.random.uniform(ks[4], (1, DIM3), jnp.float32, -bd3, bd3)     # Linear(16,1).weight
    b3 = jax.random.uniform(ks[5], (1,), jnp.float32, -bd3, bd3)
    g1 = jnp.ones((DIM2,), jnp.float32)
    be1 = jnp.zeros((DIM2,), jnp.float32)
    g2 = jnp.ones((DIM3,), jnp.float32)
    be2 = jnp.zeros((DIM3,), jnp.float32)
    return (w1, b1, g1, be1, w2, b2, g2, be2, w3, b3)


def _bn_train_ref(h, gamma, beta):
    mean = jnp.mean(h, axis=0, keepdims=True)
    var = jnp.mean((h - mean) ** 2, axis=0, keepdims=True)   # biased, torch train mode
    return (h - mean) * lax.rsqrt(var + EPS) * gamma + beta


def _leaky_ref(h):
    return jnp.where(h >= 0, h, SLOPE * h)


def reference(x, params):
    (w1, b1, g1, be1, w2, b2, g2, be2, w3, b3) = params
    h = x @ w1.T + b1
    h = _leaky_ref(_bn_train_ref(h, g1, be1))
    h = h @ w2.T + b2
    h = _leaky_ref(_bn_train_ref(h, g2, be2))
    return h @ w3.T + b3


if __name__ == "__main__":
    key = jax.random.PRNGKey(0)
    kx1, kx2, kx3, kp = jax.random.split(key, 4)
    params = init_params(kp)
    packed = pack_params(params)     # built once, outside the per-call hot path

    # Primary small-shape run: (batch=8, 1) as implied by MetricsTransform.forward.
    x = jax.random.normal(kx1, (8, 1), jnp.float32)
    out = jax.block_until_ready(metrics_transform_jit(x, packed))
    ref = reference(x, params)
    assert out.shape == (8, 1)
    assert jnp.allclose(out, ref, atol=1e-4, rtol=1e-4), (out, ref)

    # Lane-aligned batch -> statically maskless grid-less variant.
    x2 = jax.random.normal(kx2, (256, 1), jnp.float32)
    out2 = jax.block_until_ready(metrics_transform_jit(x2, packed))
    assert jnp.allclose(out2, reference(x2, params), atol=1e-4, rtol=1e-4)

    # Lane-chunked grid + two-pass BN2 path (forced at a modest size for the test).
    x3 = jax.random.normal(kx3, (20000, 1), jnp.float32)
    out3 = jax.block_until_ready(metrics_transform_jit(x3, packed, force_grid=True))
    assert jnp.allclose(out3, reference(x3, params), atol=1e-3, rtol=1e-3)

    print("KERNEL_OK")
</pallas_src>

<mosaic_0001>
module attributes {stable_mosaic.version = 11 : i64} {
  func.func @_kernel_nogrid(%arg0: memref<1xi32, #tpu.memory_space<smem>>, %arg1: memref<1xf32, #tpu.memory_space<smem>>, %arg2: memref<1x128xf32, #tpu.memory_space<vmem>>, %arg3: memref<64x2xf32, #tpu.memory_space<vmem>>, %arg4: memref<16x64xf32, #tpu.memory_space<vmem>>, %arg5: memref<16x4xf32, #tpu.memory_space<vmem>>, %arg6: memref<1x128xf32, #tpu.memory_space<vmem>>) attributes {dimension_semantics = [], scalar_prefetch = 0 : i64, scratch_operands = 0 : i64, tpu.core_type = #tpu.core_type<tc>} {
    %c0 = arith.constant 0 : index
    %c0_0 = arith.constant 0 : index
    %0 = vector.load %arg2[%c0, %c0_0] : memref<1x128xf32, #tpu.memory_space<vmem>>, vector<1x128xf32>
    %c0_1 = arith.constant 0 : index
    %c0_2 = arith.constant 0 : index
    %1 = vector.load %arg3[%c0_1, %c0_2] : memref<64x2xf32, #tpu.memory_space<vmem>>, vector<64x1xf32>
    %c0_3 = arith.constant 0 : index
    %c1 = arith.constant 1 : index
    %2 = vector.load %arg3[%c0_3, %c1] : memref<64x2xf32, #tpu.memory_space<vmem>>, vector<64x1xf32>
    %3 = vector.broadcast %1 : vector<64x1xf32> to vector<64x128xf32>
    %4 = vector.broadcast %0 : vector<1x128xf32> to vector<64x128xf32>
    %5 = arith.mulf %3, %4 : vector<64x128xf32>
    %6 = vector.broadcast %2 : vector<64x1xf32> to vector<64x128xf32>
    %7 = arith.addf %5, %6 : vector<64x128xf32>
    %cst = arith.constant 0.00999999977 : f32
    %8 = vector.broadcast %cst : f32 to vector<64x128xf32>
    %9 = arith.mulf %8, %7 : vector<64x128xf32>
    %10 = arith.maximumf %7, %9 : vector<64x128xf32>
    %c0_4 = arith.constant 0 : index
    %c0_5 = arith.constant 0 : index
    %11 = vector.load %arg4[%c0_4, %c0_5] : memref<16x64xf32, #tpu.memory_space<vmem>>, vector<16x64xf32>
    %cst_6 = arith.constant dense<0.000000e+00> : vector<16x128xf32>
    %12 = tpu.matmul %11, %10, %cst_6 {dimension_numbers = #tpu.dot_dimension_numbers<[1], [0], [0], [1], [0, 0, 1, 1], [], []>} : vector<16x64xf32>, vector<64x128xf32>, vector<16x128xf32> -> vector<16x128xf32>
    %c0_7 = arith.constant 0 : index
    %13 = memref.load %arg1[%c0_7] : memref<1xf32, #tpu.memory_space<smem>>
    %c0_8 = arith.constant 0 : index
    %14 = memref.load %arg0[%c0_8] : memref<1xi32, #tpu.memory_space<smem>>
    %15 = tpu.iota {dimensions = array<i32: 1>} : vector<1x128xi32>
    %16 = vector.broadcast %14 : i32 to vector<1x128xi32>
    %17 = arith.cmpi slt, %15, %16 : vector<1x128xi32>
    %18 = arith.extui %17 : vector<1x128xi1> to vector<1x128xi32>
    %19 = arith.sitofp %18 : vector<1x128xi32> to vector<1x128xf32>
    %20 = vector.broadcast %19 : vector<1x128xf32> to vector<16x128xf32>
    %21 = arith.mulf %12, %20 : vector<16x128xf32>
    %cst_9 = arith.constant dense<0.000000e+00> : vector<16xf32>
    %22 = vector.multi_reduction <add>, %21, %cst_9 [1] : vector<16x128xf32> to vector<16xf32>
    %23 = vector.shape_cast %22 : vector<16xf32> to vector<16x1xf32>
    %24 = vector.broadcast %13 : f32 to vector<16x1xf32>
    %25 = arith.mulf %23, %24 : vector<16x1xf32>
    %26 = vector.broadcast %25 : vector<16x1xf32> to vector<16x128xf32>
    %27 = arith.subf %12, %26 : vector<16x128xf32>
    %28 = vector.broadcast %19 : vector<1x128xf32> to vector<16x128xf32>
    %29 = arith.mulf %27, %28 : vector<16x128xf32>
    %30 = arith.mulf %29, %27 : vector<16x128xf32>
    %cst_10 = arith.constant dense<0.000000e+00> : vector<16xf32>
    %31 = vector.multi_reduction <add>, %30, %cst_10 [1] : vector<16x128xf32> to vector<16xf32>
    %32 = vector.shape_cast %31 : vector<16xf32> to vector<16x1xf32>
    %33 = vector.broadcast %13 : f32 to vector<16x1xf32>
    %34 = arith.mulf %32, %33 : vector<16x1xf32>
    %c0_11 = arith.constant 0 : index
    %c0_12 = arith.constant 0 : index
    %35 = vector.load %arg5[%c0_11, %c0_12] : memref<16x4xf32, #tpu.memory_space<vmem>>, vector<16x1xf32>
    %c0_13 = arith.constant 0 : index
    %c1_14 = arith.constant 1 : index
    %36 = vector.load %arg5[%c0_13, %c1_14] : memref<16x4xf32, #tpu.memory_space<vmem>>, vector<16x1xf32>
    %c0_15 = arith.constant 0 : index
    %c2 = arith.constant 2 : index
    %37 = vector.load %arg5[%c0_15, %c2] : memref<16x4xf32, #tpu.memory_space<vmem>>, vector<16x1xf32>
    %c0_16 = arith.constant 0 : index
    %c3 = arith.constant 3 : index
    %38 = vector.load %arg5[%c0_16, %c3] : memref<16x4xf32, #tpu.memory_space<vmem>>, vector<1x1xf32>
    %cst_17 = arith.constant 9.99999974E-6 : f32
    %39 = vector.broadcast %cst_17 : f32 to vector<16x1xf32>
    %40 = arith.addf %34, %39 : vector<16x1xf32>
    %41 = math.rsqrt %40 : vector<16x1xf32>
    %42 = arith.mulf %35, %41 : vector<16x1xf32>
    %43 = vector.broadcast %42 : vector<16x1xf32> to vector<16x128xf32>
    %44 = arith.mulf %27, %43 : vector<16x128xf32>
    %45 = vector.broadcast %36 : vector<16x1xf32> to vector<16x128xf32>
    %46 = arith.addf %44, %45 : vector<16x128xf32>
    %cst_18 = arith.constant 0.00999999977 : f32
    %47 = vector.broadcast %cst_18 : f32 to vector<16x128xf32>
    %48 = arith.mulf %47, %46 : vector<16x128xf32>
    %49 = arith.maximumf %46, %48 : vector<16x128xf32>
    %50 = vector.broadcast %37 : vector<16x1xf32> to vector<16x128xf32>
    %51 = arith.mulf %50, %49 : vector<16x128xf32>
    %cst_19 = arith.constant dense<0.000000e+00> : vector<128xf32>
    %52 = vector.multi_reduction <add>, %51, %cst_19 [0] : vector<16x128xf32> to vector<128xf32>
    %53 = vector.shape_cast %52 : vector<128xf32> to vector<1x128xf32>
    %54 = vector.broadcast %38 : vector<1x1xf32> to vector<1x128xf32>
    %55 = arith.addf %53, %54 : vector<1x128xf32>
    %c0_20 = arith.constant 0 : index
    %c0_21 = arith.constant 0 : index
    %56 = vector.load %arg6[%c0_20, %c0_21] : memref<1x128xf32, #tpu.memory_space<vmem>>, vector<1x128xf32>
    tpu.vector_store %arg6[%c0_20, %c0_21], %55 {strides = array<i32>} : memref<1x128xf32, #tpu.memory_space<vmem>>, vector<1x128xf32>,
    return
  }
}

</mosaic_0001>

<llo_original>
// kernel: metrics_transform.1
$region0: #{metrics_transform.1}
  #allocation0 [shape = 'u32[]', space=smem, size = 0x4, offset = 0x4, fixed_abs, tag = 'smem constant byte address 0x4 - core index']
  #allocation1 [shape = 'u32[144,128]{1,0:T(1,128)}', space=vmem, size = 0x12000, scoped, tag = 'internal scratch']
  #allocation2 [shape = 's32[1]{0:T(128)S(6)}', space=smem, size = 0x200, scoped, tag = 'scoped memory for metrics_transform.1']
  #allocation3 [shape = 'f32[1]{0:T(128)S(6)}', space=smem, size = 0x200, scoped, tag = 'scoped memory for metrics_transform.1']
  %s0 = inlined_call_operand.<no memory space> [shape: s32[1], index: 0, kind: input, shape index: {}]
  %s1 = inlined_call_operand.<no memory space> [shape: f32[1], index: 1, kind: input, shape index: {}]
  %s2 = inlined_call_operand.vmem [shape: f32[1,128], index: 2, kind: input, shape index: {}]
  %s3 = inlined_call_operand.vmem [shape: f32[64,2], index: 3, kind: input, shape index: {}]
  %s4 = inlined_call_operand.vmem [shape: f32[16,64], index: 4, kind: input, shape index: {}]
  %s5 = inlined_call_operand.vmem [shape: f32[16,4], index: 5, kind: input, shape index: {}]
  %s6 = inlined_call_operand.vmem [shape: f32[1,128], index: 6, kind: output, shape index: {}]
  %s7 = sld [smem:[#allocation0]]
  $region34: #{metrics_transform.1} parent=0
    _
  %s9 = ssub.s32 1, %s7
  %s10 = scalar_select 0, %s9, %s7
  %11 = sst [smem:[#allocation2]] %s0
  %12 = sst [smem:[#allocation3]] %s1
  // Predicated region
  $region2: #{metrics_transform.1} parent=0 // pred_check
    _
  $region3: #{metrics_transform.1} parent=0 // pred_check_branch
    %14 = sbr.rel (0) target = $region5
  $region4: #{metrics_transform.1} parent=0 // pred_region
    _
  $region5: #{metrics_transform.1} parent=0 // pred_fallthru
    _
  // Predicated region
  $region6: #{metrics_transform.1} parent=0 // pred_check
    _
  $region7: #{metrics_transform.1} parent=0 // pred_check_branch
    %16 = sbr.rel (0) target = $region9
  $region8: #{metrics_transform.1} parent=0 // pred_region
    _
  $region9: #{metrics_transform.1} parent=0 // pred_fallthru
    _
  // Predicated region
  $region10: #{metrics_transform.1} parent=0 // pred_check
    _
  $region11: #{metrics_transform.1} parent=0 // pred_check_branch
    %18 = sbr.rel (0) target = $region13
  $region12: #{metrics_transform.1} parent=0 // pred_region
    _
  $region13: #{metrics_transform.1} parent=0 // pred_fallthru
    _
  // Predicated region
  $region14: #{metrics_transform.1} parent=0 // pred_check
    _
  $region15: #{metrics_transform.1} parent=0 // pred_check_branch
    %20 = sbr.rel (0) target = $region17
  $region16: #{metrics_transform.1} parent=0 // pred_region
    _
  $region17: #{metrics_transform.1} parent=0 // pred_fallthru
    _
  // Predicated region
  $region18: #{metrics_transform.1} parent=0 // pred_check
    _
  $region19: #{metrics_transform.1} parent=0 // pred_check_branch
    %22 = sbr.rel (0) target = $region21
  $region20: #{metrics_transform.1} parent=0 // pred_region
    _
  $region21: #{metrics_transform.1} parent=0 // pred_fallthru
    _
  // Predicated region
  $region22: #{metrics_transform.1} parent=0 // pred_check
    _
  $region23: #{metrics_transform.1} parent=0 // pred_check_branch
    %24 = sbr.rel (0) target = $region25
  $region24: #{metrics_transform.1} parent=0 // pred_region
    _
  $region25: #{metrics_transform.1} parent=0 // pred_fallthru
    _
  %v25 = vld [vmem:[%s2] sm:$0x1]
  %v26 = vld [vmem:[%s3] sm:$0xff]
  %v27 = vld [vmem:[%s3 + $0x8] sm:$0xff]
  %v28 = vld [vmem:[%s3 + $0x10] sm:$0xff]
  %v29 = vld [vmem:[%s3 + $0x18] sm:$0xff]
  %v30 = vld [vmem:[%s3 + $0x20] sm:$0xff]
  %v31 = vld [vmem:[%s3 + $0x28] sm:$0xff]
  %v32 = vld [vmem:[%s3 + $0x30] sm:$0xff]
  %v33 = vld [vmem:[%s3 + $0x38] sm:$0xff]
  %35 = vset.pattern.permute.xlu0 0
  %36 = vperm.xlu0 %35, %v26
  %v37 = vpop.permute.xlu0 %36
  %40 = vset.pattern.permute.xlu0 0
  %41 = vperm.xlu0 %40, %v27
  %v42 = vpop.permute.xlu0 %41
  %45 = vset.pattern.permute.xlu0 0
  %46 = vperm.xlu0 %45, %v28
  %v47 = vpop.permute.xlu0 %46
  %50 = vset.pattern.permute.xlu0 0
  %51 = vperm.xlu0 %50, %v29
  %v52 = vpop.permute.xlu0 %51
  %55 = vset.pattern.permute.xlu0 0
  %56 = vperm.xlu0 %55, %v30
  %v57 = vpop.permute.xlu0 %56
  %60 = vset.pattern.permute.xlu0 0
  %61 = vperm.xlu0 %60, %v31
  %v62 = vpop.permute.xlu0 %61
  %65 = vset.pattern.permute.xlu0 0
  %66 = vperm.xlu0 %65, %v32
  %v67 = vpop.permute.xlu0 %66
  %70 = vset.pattern.permute.xlu0 0
  %71 = vperm.xlu0 %70, %v33
  %v72 = vpop.permute.xlu0 %71
  %v75 = vlaneseq
  %v76 = vshrl.u32 %v75, 7
  %v77 = vsub.s32 0, %v76
  %v78 = vrot.slane %v25, %v77
  %v80 = vmul.f32 %v37, %v78
  %v81 = vmul.f32 %v42, %v78
  %v82 = vmul.f32 %v47, %v78
  %v83 = vmul.f32 %v52, %v78
  %v84 = vmul.f32 %v57, %v78
  %v85 = vmul.f32 %v62, %v78
  %v86 = vmul.f32 %v67, %v78
  %v87 = vmul.f32 %v72, %v78
  %88 = vset.pattern.permute.xlu0 1
  %89 = vperm.xlu0 %88, %v26
  %v90 = vpop.permute.xlu0 %89
  %92 = vset.pattern.permute.xlu0 1
  %93 = vperm.xlu0 %92, %v27
  %v94 = vpop.permute.xlu0 %93
  %96 = vset.pattern.permute.xlu0 1
  %97 = vperm.xlu0 %96, %v28
  %v98 = vpop.permute.xlu0 %97
  %100 = vset.pattern.permute.xlu0 1
  %101 = vperm.xlu0 %100, %v29
  %v102 = vpop.permute.xlu0 %101
  %104 = vset.pattern.permute.xlu0 1
  %105 = vperm.xlu0 %104, %v30
  %v106 = vpop.permute.xlu0 %105
  %108 = vset.pattern.permute.xlu0 1
  %109 = vperm.xlu0 %108, %v31
  %v110 = vpop.permute.xlu0 %109
  %112 = vset.pattern.permute.xlu0 1
  %113 = vperm.xlu0 %112, %v32
  %v114 = vpop.permute.xlu0 %113
  %116 = vset.pattern.permute.xlu0 1
  %117 = vperm.xlu0 %116, %v33
  %v118 = vpop.permute.xlu0 %117
  %v120 = vadd.f32 %v80, %v90
  %v121 = vadd.f32 %v81, %v94
  %v122 = vadd.f32 %v82, %v98
  %v123 = vadd.f32 %v83, %v102
  %v124 = vadd.f32 %v84, %v106
  %v125 = vadd.f32 %v85, %v110
  %v126 = vadd.f32 %v86, %v114
  %v127 = vadd.f32 %v87, %v118
  %v128 = vmul.f32 %v120, 0.01
  %v129 = vmul.f32 %v121, 0.01
  %v130 = vmul.f32 %v122, 0.01
  %v131 = vmul.f32 %v123, 0.01
  %v132 = vmul.f32 %v124, 0.01
  %v133 = vmul.f32 %v125, 0.01
  %v134 = vmul.f32 %v126, 0.01
  %v135 = vmul.f32 %v127, 0.01
  %v136 = vmax.f32 %v120, %v128
  %v137 = vmax.f32 %v121, %v129
  %v138 = vmax.f32 %v122, %v130
  %v139 = vmax.f32 %v123, %v131
  %v140 = vmax.f32 %v124, %v132
  %v141 = vmax.f32 %v125, %v133
  %v142 = vmax.f32 %v126, %v134
  %v143 = vmax.f32 %v127, %v135
  %v144 = vld [vmem:[%s4] sm:$0xff]
  %v145 = vld [vmem:[%s4 + $0x8] sm:$0xff]
  %vm146 = vcmask 523264
  %v148 = vsel %vm146, %v144, 0
  %v151 = vsel %vm146, %v145, 0
  %153 = vmatprep.subr.mxu0 0.0
  %154 = vmatpush1.msra.mxu0 %v136
  %155 = vmatprep.subr.mxu0 0.0
  %156 = vmatpush1.msra.mxu0 %v137
  %157 = vmatprep.subr.mxu0 0.0
  %158 = vmatpush1.msra.mxu0 %v138
  %159 = vmatprep.subr.mxu0 0.0
  %160 = vmatpush1.msra.mxu0 %v139
  %161 = vmatprep.subr.mxu0 0.0
  %162 = vmatpush1.msra.mxu0 %v140
  %163 = vmatprep.subr.mxu0 0.0
  %164 = vmatpush1.msra.mxu0 %v141
  %165 = vmatprep.subr.mxu0 0.0
  %166 = vmatpush1.msra.mxu0 %v142
  %167 = vmatprep.subr.mxu0 0.0
  %168 = vmatpush1.msra.mxu0 %v143
  %169 = vmatprep.subr.mxu0 0.0
  %170 = vmatpush1.msra.mxu0 0.0
  %171 = vmatprep.subr.mxu0 0.0
  %172 = vmatpush1.msra.mxu0 0.0
  %173 = vmatprep.subr.mxu0 0.0
  %174 = vmatpush1.msra.mxu0 0.0
  %175 = vmatprep.subr.mxu0 0.0
  %176 = vmatpush1.msra.mxu0 0.0
  %177 = vmatprep.subr.mxu0 0.0
  %178 = vmatpush1.msra.mxu0 0.0
  %179 = vmatprep.subr.mxu0 0.0
  %180 = vmatpush1.msra.mxu0 0.0
  %181 = vmatprep.subr.mxu0 0.0
  %182 = vmatpush1.msra.mxu0 0.0
  %183 = vmatprep.subr.mxu0 0.0
  %184 = vmatpush1.msra.mxu0 0.0
  %185 = vmatprep.subr.mxu0 0.0
  %186 = vmatpush1.msra.mxu0 0.0
  %187 = vmatprep.subr.mxu0 0.0
  %188 = vmatpush1.msra.mxu0 0.0
  %189 = vmatprep.subr.mxu0 0.0
  %190 = vmatpush1.msra.mxu0 0.0
  %191 = vmatprep.subr.mxu0 0.0
  %192 = vmatpush1.msra.mxu0 0.0
  %193 = vmatprep.subr.mxu0 0.0
  %194 = vmatpush1.msra.mxu0 0.0
  %195 = vmatprep.subr.mxu0 0.0
  %196 = vmatpush1.msra.mxu0 0.0
  %197 = vmatprep.subr.mxu0 0.0
  %198 = vmatpush1.msra.mxu0 0.0
  %199 = vmatprep.subr.mxu0 0.0
  %200 = vmatpush1.msra.mxu0 0.0
  %201 = vmatprep.subr.mxu0 0.0
  %202 = vmatpush1.msra.mxu0 0.0
  %203 = vmatprep.subr.mxu0 0.0
  %204 = vmatpush1.msra.mxu0 0.0
  %205 = vmatprep.subr.mxu0 0.0
  %206 = vmatpush1.msra.mxu0 0.0
  %207 = vmatprep.subr.mxu0 0.0
  %208 = vmatpush1.msra.mxu0 0.0
  %209 = vmatprep.subr.mxu0 0.0
  %210 = vmatpush1.msra.mxu0 0.0
  %211 = vmatprep.subr.mxu0 0.0
  %212 = vmatpush1.msra.mxu0 0.0
  %213 = vmatprep.subr.mxu0 0.0
  %214 = vmatpush1.msra.mxu0 0.0
  %215 = vmatprep.subr.mxu0 0.0
  %216 = vmatpush1.msra.mxu0 0.0
  %217 = vmatprep.mubr.f32.mxu0 0.0
  %218 = vmatmul.mubr.f32.gmra.mrb[0].mxu0 %v148
  %v219 = vpop.f32.mrb[0].mxu0
  %v220 = vadd.f32 0.0, %v219
  %v221 = vpop.f32.mrb[0].mxu0
  %222 = vmatprep.mubr.f32.mxu0 0.0
  %223 = vmatmul.mubr.f32.gmra.mrb[0].mxu0 %v151
  %v224 = vpop.f32.mrb[0].mxu0
  %v225 = vadd.f32 0.0, %v224
  %v226 = vpop.f32.mrb[0].mxu0
  %227 = vdwg.mxu0
  %s228 = sld [smem:[#allocation3]]
  %s229 = sld [smem:[#allocation2]]
  %v230 = vlaneseq
  %v231 = vand.u32 %v230, 127
  %v232 = vstv %s229
  %vm233 = vcmp.lt.s32.totalorder %v231, %v232
  %v234 = vsel %vm233, 1, 0
  %v235 = vcvt.s32.f32 %v234
  %v236 = vmul.f32 %v220, %v235
  %v237 = vmul.f32 %v225, %v235
  %238 = vadd.xlane.f32.xlu0 %v236
  %v239 = vpop.xlane.xlu0 %238
  %240 = vadd.xlane.f32.xlu0 %v237
  %v241 = vpop.xlane.xlu0 %240
  %v242 = vstv %s228
  %v243 = vmul.f32 %v239, %v242
  %v244 = vmul.f32 %v241, %v242
  %v245 = vsub.f32 %v220, %v243
  %v246 = vsub.f32 %v225, %v244
  %v247 = vmul.f32 %v245, %v235
  %v248 = vmul.f32 %v246, %v235
  %v249 = vmul.f32 %v247, %v245
  %v250 = vmul.f32 %v248, %v246
  %251 = vadd.xlane.f32.xlu0 %v249
  %v252 = vpop.xlane.xlu0 %251
  %253 = vadd.xlane.f32.xlu0 %v250
  %v254 = vpop.xlane.xlu0 %253
  %v255 = vmul.f32 %v252, %v242
  %v256 = vmul.f32 %v254, %v242
  %v257 = vld [vmem:[%s5] sm:$0xff]
  %v258 = vld [vmem:[%s5 + $0x8] sm:$0xff]
  %v259 = vld [vmem:[%s5] sm:$0x1]
  %v260 = vadd.f32 %v255, 1e-05
  %v261 = vadd.f32 %v256, 1e-05
  %v262 = vrsqrt.pop %v260
  %v263 = vrsqrt.pop %v261
  %v264 = vmul.f32 %v257, %v262
  %v265 = vmul.f32 %v258, %v263
  %267 = vset.pattern.permute.xlu0 0
  %268 = vperm.xlu0 %267, %v264
  %v269 = vpop.permute.xlu0 %268
  %272 = vset.pattern.permute.xlu0 0
  %273 = vperm.xlu0 %272, %v265
  %v274 = vpop.permute.xlu0 %273
  %v276 = vmul.f32 %v245, %v269
  %v277 = vmul.f32 %v246, %v274
  %279 = vset.pattern.permute.xlu0 1
  %280 = vperm.xlu0 %279, %v257
  %v281 = vpop.permute.xlu0 %280
  %284 = vset.pattern.permute.xlu0 1
  %285 = vperm.xlu0 %284, %v258
  %v286 = vpop.permute.xlu0 %285
  %v288 = vadd.f32 %v276, %v281
  %v289 = vadd.f32 %v277, %v286
  %v290 = vmul.f32 %v288, 0.01
  %v291 = vmul.f32 %v289, 0.01
  %v292 = vmax.f32 %v288, %v290
  %v293 = vmax.f32 %v289, %v291
  %294 = vset.pattern.permute.xlu0 2
  %295 = vperm.xlu0 %294, %v257
  %v296 = vpop.permute.xlu0 %295
  %298 = vset.pattern.permute.xlu0 2
  %299 = vperm.xlu0 %298, %v258
  %v300 = vpop.permute.xlu0 %299
  %v302 = vmul.f32 %v296, %v292
  %v303 = vmul.f32 %v300, %v293
  %v304 = vadd.f32 %v302, %v303
  %v305 = vrot.slane %v304, 4
  %v306 = vadd.f32 %v304, %v305
  %v307 = vrot.slane %v306, 2
  %v308 = vadd.f32 %v306, %v307
  %v309 = vrot.slane %v308, 1
  %v310 = vadd.f32 %v308, %v309
  %312 = vset.pattern.permute.xlu0 3
  %313 = vperm.xlu0 %312, %v259
  %v314 = vpop.permute.xlu0 %313
  %v316 = vadd.f32 %v310, %v314
  %317 = vst [vmem:[%s6] sm:$0x1] %v316
  // Predicated region
  $region26: #{metrics_transform.1} parent=0 // pred_check
    _
  $region27: #{metrics_transform.1} parent=0 // pred_check_branch
    %319 = sbr.rel (0) target = $region29
  $region28: #{metrics_transform.1} parent=0 // pred_region
    _
  $region29: #{metrics_transform.1} parent=0 // pred_fallthru
    _
  // Predicated region
  $region30: #{metrics_transform.1} parent=0 // pred_check
    _
  $region31: #{metrics_transform.1} parent=0 // pred_check_branch
    %321 = sbr.rel (0) target = $region33
  $region32: #{metrics_transform.1} parent=0 // pred_region
    _
  $region33: #{metrics_transform.1} parent=0 // pred_fallthru
    _

</llo_original>
